<compile_context>
chip_gen: v5e
topology: v5e:2x2
jax: 0.10.0
libtpu: 0.0.40
codegen_flags: <defaults>
</compile_context>

<pallas_src>
import numpy as np
import jax
import jax.numpy as jnp
from jax.experimental import pallas as pl
from jax.experimental.pallas import tpu as pltpu

EPS = 1e-5  # nn.LayerNorm default eps


# ----------------------------- Pallas kernel -------------------------------

def _patch_merging_kernel(x_ref, w_ref, b_ref, o_ref):
    # x_ref: (TI, 2, Wh, 2C)  -- TI row-pairs of the padded map.
    #        dim 1 = di (row parity inside the 2x2 patch); lane layout of the
    #        last dim is (dj, c), i.e. [x(., 2j, c...), x(., 2j+1, c...)].
    # w_ref: (2, 2C, 2Cout)   gamma-scaled reduction weight (input-major), permuted
    #                         to kernel channel order and split into di=0 / di=1 halves.
    # b_ref: (1, 2Cout)       constant output bias = beta @ W^T.
    # o_ref: (TI*Wh, 2Cout)
    ti, _, wh, c2 = x_ref.shape
    tr = ti * wh
    inv_c4 = 1.0 / (2.0 * c2)

    xb = x_ref[...]                                      # (TI, 2, Wh, 2C)
    xe = xb[:, 0].reshape(tr, c2).astype(jnp.float32)    # di = 0 rows -> (TR, 2C)
    xo = xb[:, 1].reshape(tr, c2).astype(jnp.float32)    # di = 1 rows -> (TR, 2C)

    # LayerNorm statistics over the (virtual) concatenated 4C vector.
    mu = (jnp.sum(xe, axis=-1, keepdims=True) +
          jnp.sum(xo, axis=-1, keepdims=True)) * inv_c4
    de = xe - mu
    do = xo - mu
    var = (jnp.sum(de * de, axis=-1, keepdims=True) +
           jnp.sum(do * do, axis=-1, keepdims=True)) * inv_c4
    rs = jax.lax.rsqrt(var + EPS)                        # EUP

    # gamma already folded into w_ref rows; per-row rsqrt scale applied after the
    # matmul (2Cout wide instead of 4C wide); beta folded into b_ref.
    acc = jnp.dot(de, w_ref[0], preferred_element_type=jnp.float32)
    acc = acc + jnp.dot(do, w_ref[1], preferred_element_type=jnp.float32)
    o_ref[...] = (acc * rs + b_ref[...]).astype(o_ref.dtype)


# ------------------------------- wrapper ------------------------------------

def _pick_row_tile(rp, wh, row_bytes, vmem_budget=8 * 1024 * 1024):
    """Largest TI dividing rp with TI*wh a multiple of 8 (sublane aligned, no masked
    stores) whose double-buffered in+out tile traffic stays under vmem_budget."""
    candidates = []
    for ti in range(1, rp + 1):
        if rp % ti:
            continue
        rows = ti * wh
        if rows % 8 != 0 and ti != rp:
            continue
        candidates.append(ti)
    within = [ti for ti in candidates if 2 * ti * wh * row_bytes <= vmem_budget]
    if within:
        return max(within)
    return min(candidates)


def patch_merging(x, H, W, gamma, beta, reduction_weight):
    """
    x: (B, H*W, C); gamma/beta: (4C,); reduction_weight: (2C, 4C) (torch Linear layout).
    Returns (B, ceil(H/2)*ceil(W/2), 2C).
    """
    B, L, C = x.shape
    assert L == H * W, 'input feature has wrong size !'

    xin = x.reshape(B, H, W, C)
    if H % 2 == 1 or W % 2 == 1:
        xin = jnp.pad(xin, ((0, 0), (0, H % 2), (0, W % 2), (0, 0)))
    Hp, Wp = xin.shape[1], xin.shape[2]
    Hh, Wh = Hp // 2, Wp // 2
    Cout2 = 2 * C

    # Contiguous (zero-copy) view: (B*Hh, 2(di), Wh, 2C) with lane layout (dj, c).
    x4 = xin.reshape(B * Hh, 2, Wh, 2 * C)

    # Kernel channel order is (di, dj, c); PyTorch concat order is (dj, di, c).
    q = np.arange(4 * C)
    di = q // (2 * C)
    dj = (q // C) % 2
    c = q % C
    perm = (2 * dj + di) * C + c                        # kernel idx -> torch idx

    gamma_f = jnp.asarray(gamma, jnp.float32)
    beta_f = jnp.asarray(beta, jnp.float32)
    w_in_out = jnp.asarray(reduction_weight, jnp.float32).T   # (4C, 2Cout), input-major

    # Fold gamma into the weight rows, beta into a constant output bias, and permute
    # rows into the kernel's (di, dj, c) channel order.
    wg = gamma_f[:, None] * w_in_out                    # (4C, 2Cout), torch order
    wk = wg[perm, :].reshape(2, 2 * C, Cout2)           # (2, 2C, 2Cout), kernel order
    bias = (beta_f @ w_in_out).reshape(1, Cout2)        # (1, 2Cout)

    Rp = B * Hh
    row_bytes = (2 * C) * x.dtype.itemsize + Cout2 * x.dtype.itemsize
    TI = _pick_row_tile(Rp, Wh, row_bytes)
    TR = TI * Wh
    nblk = Rp // TI

    out = pl.pallas_call(
        _patch_merging_kernel,
        out_shape=jax.ShapeDtypeStruct((Rp * Wh, Cout2), x.dtype),
        grid=(nblk,),
        in_specs=[
            pl.BlockSpec((TI, 2, Wh, 2 * C), lambda i: (i, 0, 0, 0)),
            pl.BlockSpec((2, 2 * C, Cout2), lambda i: (0, 0, 0)),
            pl.BlockSpec((1, Cout2), lambda i: (0, 0)),
        ],
        out_specs=pl.BlockSpec((TR, Cout2), lambda i: (i, 0)),
        compiler_params=pltpu.CompilerParams(
            dimension_semantics=("parallel",),
            vmem_limit_bytes=64 * 1024 * 1024),
    )(x4, wk, bias)

    return out.reshape(B, Hh * Wh, Cout2)


# --------------------------- pure-JAX reference ------------------------------

def patch_merging_ref(x, H, W, gamma, beta, reduction_weight):
    B, L, C = x.shape
    xin = x.reshape(B, H, W, C)
    if H % 2 == 1 or W % 2 == 1:
        xin = jnp.pad(xin, ((0, 0), (0, H % 2), (0, W % 2), (0, 0)))
    x0 = xin[:, 0::2, 0::2, :]
    x1 = xin[:, 1::2, 0::2, :]
    x2 = xin[:, 0::2, 1::2, :]
    x3 = xin[:, 1::2, 1::2, :]
    y = jnp.concatenate([x0, x1, x2, x3], axis=-1).reshape(B, -1, 4 * C)
    mu = jnp.mean(y, axis=-1, keepdims=True)
    var = jnp.mean((y - mu) ** 2, axis=-1, keepdims=True)
    yn = (y - mu) / jnp.sqrt(var + EPS) * gamma + beta
    return yn @ reduction_weight.T


# --------------------------------- test --------------------------------------

if __name__ == "__main__":
    key = jax.random.PRNGKey(0)

    def make_params(k, dim):
        kg, kb, kw = jax.random.split(k, 3)
        gamma = 1.0 + 0.1 * jax.random.normal(kg, (4 * dim,), jnp.float32)
        beta = 0.1 * jax.random.normal(kb, (4 * dim,), jnp.float32)
        w = 0.02 * jax.random.normal(kw, (2 * dim, 4 * dim), jnp.float32)
        return gamma, beta, w

    # Case 1: even spatial dims (no padding path).  B=2, H=W=16, dim=32.
    k1, k2, kp1, kp2 = jax.random.split(key, 4)
    B, H, W, dim = 2, 16, 16, 32
    x = jax.random.normal(k1, (B, H * W, dim), jnp.float32)
    gamma, beta, w = make_params(kp1, dim)
    y = jax.block_until_ready(patch_merging(x, H, W, gamma, beta, w))
    y_ref = patch_merging_ref(x, H, W, gamma, beta, w)
    assert y.shape == (B, (H // 2) * (W // 2), 2 * dim)
    assert bool(jnp.all(jnp.isfinite(y)))
    assert bool(jnp.allclose(y, y_ref, atol=1e-4, rtol=1e-4))

    # Case 2: odd H (exercises the zero-padding path).  B=1, H=17, W=16, dim=16.
    B2, H2, W2, dim2 = 1, 17, 16, 16
    x2 = jax.random.normal(k2, (B2, H2 * W2, dim2), jnp.float32)
    gamma2, beta2, w2 = make_params(kp2, dim2)
    y2 = jax.block_until_ready(patch_merging(x2, H2, W2, gamma2, beta2, w2))
    y2_ref = patch_merging_ref(x2, H2, W2, gamma2, beta2, w2)
    assert y2.shape == (B2, ((H2 + 1) // 2) * (W2 // 2), 2 * dim2)
    assert bool(jnp.all(jnp.isfinite(y2)))
    assert bool(jnp.allclose(y2, y2_ref, atol=1e-4, rtol=1e-4))

    print("KERNEL_OK")
</pallas_src>

<mosaic_0001>
module attributes {stable_mosaic.version = 11 : i64} {
  func.func @_patch_merging_kernel(%arg0: i32, %arg1: memref<16x2x8x64xf32, #tpu.memory_space<vmem>>, %arg2: memref<2x64x64xf32, #tpu.memory_space<vmem>>, %arg3: memref<1x64xf32, #tpu.memory_space<vmem>>, %arg4: memref<128x64xf32, #tpu.memory_space<vmem>>) attributes {dimension_semantics = [#tpu.dimension_semantics<parallel>], iteration_bounds = array<i64: 1>, scalar_prefetch = 0 : i64, scratch_operands = 0 : i64, tpu.core_type = #tpu.core_type<tc>, window_params = [{transform_indices = @transform_0, window_bounds = array<i64: 16, 2, 8, 64>}, {pipeline_mode = #tpu.pipeline_mode<synchronous>, transform_indices = @transform_1, window_bounds = array<i64: 2, 64, 64>}, {pipeline_mode = #tpu.pipeline_mode<synchronous>, transform_indices = @transform_2, window_bounds = array<i64: 1, 64>}, {transform_indices = @transform_3, window_bounds = array<i64: 128, 64>}]} {
    %c0 = arith.constant 0 : index
    %c0_0 = arith.constant 0 : index
    %c0_1 = arith.constant 0 : index
    %c0_2 = arith.constant 0 : index
    %0 = vector.load %arg1[%c0, %c0_0, %c0_1, %c0_2] : memref<16x2x8x64xf32, #tpu.memory_space<vmem>>, vector<16x2x8x64xf32>
    %1 = vector.extract_strided_slice %0 {offsets = [0, 0, 0, 0], sizes = [16, 1, 8, 64], strides = [1, 1, 1, 1]} : vector<16x2x8x64xf32> to vector<16x1x8x64xf32>
    %2 = vector.shape_cast %1 : vector<16x1x8x64xf32> to vector<16x8x64xf32>
    %3 = vector.shape_cast %2 : vector<16x8x64xf32> to vector<128x64xf32>
    %4 = vector.extract_strided_slice %0 {offsets = [0, 1, 0, 0], sizes = [16, 1, 8, 64], strides = [1, 1, 1, 1]} : vector<16x2x8x64xf32> to vector<16x1x8x64xf32>
    %5 = vector.shape_cast %4 : vector<16x1x8x64xf32> to vector<16x8x64xf32>
    %6 = vector.shape_cast %5 : vector<16x8x64xf32> to vector<128x64xf32>
    %cst = arith.constant dense<0.000000e+00> : vector<128xf32>
    %7 = vector.multi_reduction <add>, %3, %cst [1] : vector<128x64xf32> to vector<128xf32>
    %8 = vector.shape_cast %7 : vector<128xf32> to vector<128x1xf32>
    %cst_3 = arith.constant dense<0.000000e+00> : vector<128xf32>
    %9 = vector.multi_reduction <add>, %6, %cst_3 [1] : vector<128x64xf32> to vector<128xf32>
    %10 = vector.shape_cast %9 : vector<128xf32> to vector<128x1xf32>
    %11 = arith.addf %8, %10 : vector<128x1xf32>
    %cst_4 = arith.constant 7.812500e-03 : f32
    %12 = vector.broadcast %cst_4 : f32 to vector<128x1xf32>
    %13 = arith.mulf %11, %12 : vector<128x1xf32>
    %14 = vector.broadcast %13 : vector<128x1xf32> to vector<128x64xf32>
    %15 = arith.subf %3, %14 : vector<128x64xf32>
    %16 = vector.broadcast %13 : vector<128x1xf32> to vector<128x64xf32>
    %17 = arith.subf %6, %16 : vector<128x64xf32>
    %18 = arith.mulf %15, %15 : vector<128x64xf32>
    %cst_5 = arith.constant dense<0.000000e+00> : vector<128xf32>
    %19 = vector.multi_reduction <add>, %18, %cst_5 [1] : vector<128x64xf32> to vector<128xf32>
    %20 = vector.shape_cast %19 : vector<128xf32> to vector<128x1xf32>
    %21 = arith.mulf %17, %17 : vector<128x64xf32>
    %cst_6 = arith.constant dense<0.000000e+00> : vector<128xf32>
    %22 = vector.multi_reduction <add>, %21, %cst_6 [1] : vector<128x64xf32> to vector<128xf32>
    %23 = vector.shape_cast %22 : vector<128xf32> to vector<128x1xf32>
    %24 = arith.addf %20, %23 : vector<128x1xf32>
    %cst_7 = arith.constant 7.812500e-03 : f32
    %25 = vector.broadcast %cst_7 : f32 to vector<128x1xf32>
    %26 = arith.mulf %24, %25 : vector<128x1xf32>
    %cst_8 = arith.constant 9.99999974E-6 : f32
    %27 = vector.broadcast %cst_8 : f32 to vector<128x1xf32>
    %28 = arith.addf %26, %27 : vector<128x1xf32>
    %29 = math.rsqrt %28 : vector<128x1xf32>
    %c0_9 = arith.constant 0 : index
    %c0_10 = arith.constant 0 : index
    %c0_11 = arith.constant 0 : index
    %30 = vector.load %arg2[%c0_9, %c0_10, %c0_11] : memref<2x64x64xf32, #tpu.memory_space<vmem>>, vector<1x64x64xf32>
    %31 = vector.shape_cast %30 : vector<1x64x64xf32> to vector<64x64xf32>
    %cst_12 = arith.constant dense<0.000000e+00> : vector<128x64xf32>
    %32 = tpu.matmul %15, %31, %cst_12 {dimension_numbers = #tpu.dot_dimension_numbers<[1], [0], [0], [1], [0, 0, 1, 1], [], []>} : vector<128x64xf32>, vector<64x64xf32>, vector<128x64xf32> -> vector<128x64xf32>
    %c1 = arith.constant 1 : index
    %c0_13 = arith.constant 0 : index
    %c0_14 = arith.constant 0 : index
    %33 = vector.load %arg2[%c1, %c0_13, %c0_14] : memref<2x64x64xf32, #tpu.memory_space<vmem>>, vector<1x64x64xf32>
    %34 = vector.shape_cast %33 : vector<1x64x64xf32> to vector<64x64xf32>
    %cst_15 = arith.constant dense<0.000000e+00> : vector<128x64xf32>
    %35 = tpu.matmul %17, %34, %cst_15 {dimension_numbers = #tpu.dot_dimension_numbers<[1], [0], [0], [1], [0, 0, 1, 1], [], []>} : vector<128x64xf32>, vector<64x64xf32>, vector<128x64xf32> -> vector<128x64xf32>
    %36 = arith.addf %32, %35 : vector<128x64xf32>
    %37 = vector.broadcast %29 : vector<128x1xf32> to vector<128x64xf32>
    %38 = arith.mulf %36, %37 : vector<128x64xf32>
    %c0_16 = arith.constant 0 : index
    %c0_17 = arith.constant 0 : index
    %39 = vector.load %arg3[%c0_16, %c0_17] : memref<1x64xf32, #tpu.memory_space<vmem>>, vector<1x64xf32>
    %40 = vector.broadcast %39 : vector<1x64xf32> to vector<128x64xf32>
    %41 = arith.addf %38, %40 : vector<128x64xf32>
    %c0_18 = arith.constant 0 : index
    %c0_19 = arith.constant 0 : index
    %42 = vector.load %arg4[%c0_18, %c0_19] : memref<128x64xf32, #tpu.memory_space<vmem>>, vector<128x64xf32>
    tpu.vector_store %arg4[%c0_18, %c0_19], %41 {strides = array<i32>} : memref<128x64xf32, #tpu.memory_space<vmem>>, vector<128x64xf32>,
    return
  }
  func.func @transform_0(%arg0: i32) -> (i32, i32, i32, i32) {
    %c0_i32 = arith.constant 0 : i32
    %c0_i32_0 = arith.constant 0 : i32
    %c0_i32_1 = arith.constant 0 : i32
    %c0_i32_2 = arith.constant 0 : i32
    return %arg0, %c0_i32, %c0_i32_0, %c0_i32_1 : i32, i32, i32, i32
  }
  func.func @transform_1(%arg0: i32) -> (i32, i32, i32) {
    %c0_i32 = arith.constant 0 : i32
    %c0_i32_0 = arith.constant 0 : i32
    %c0_i32_1 = arith.constant 0 : i32
    %c0_i32_2 = arith.constant 0 : i32
    return %c0_i32, %c0_i32_0, %c0_i32_1 : i32, i32, i32
  }
  func.func @transform_2(%arg0: i32) -> (i32, i32) {
    %c0_i32 = arith.constant 0 : i32
    %c0_i32_0 = arith.constant 0 : i32
    %c0_i32_1 = arith.constant 0 : i32
    return %c0_i32, %c0_i32_0 : i32, i32
  }
  func.func @transform_3(%arg0: i32) -> (i32, i32) {
    %c0_i32 = arith.constant 0 : i32
    %c0_i32_0 = arith.constant 0 : i32
    return %arg0, %c0_i32 : i32, i32
  }
}

</mosaic_0001>

<llo_original>
// kernel: tpu_custom_call.1
$region0: #{tpu_custom_call.1}
  #allocation0 [shape = 'u32[]', space=smem, size = 0x4, offset = 0x4, fixed_abs, tag = 'smem constant byte address 0x4 - core index']
  #allocation1 [shape = 'u32[72,128]{1,0:T(1,128)}', space=vmem, size = 0x9000, scoped, tag = 'internal scratch']
  %s0 = inlined_call_operand.hbm [shape: f32[16,2,8,64], index: 0, kind: input, shape index: {}]
  %s1 = inlined_call_operand.hbm [shape: f32[2,64,64], index: 1, kind: input, shape index: {}]
  %s2 = inlined_call_operand.vmem [shape: f32[1,64], index: 2, kind: input, shape index: {}]
  %s3 = inlined_call_operand.vmem [shape: f32[128,64], index: 3, kind: output, shape index: {}]
  %s4 = sld [smem:[#allocation0]]
  $region30: #{tpu_custom_call.1} parent=0
    _
  %s6 = ssub.s32 1, %s4
  %s7 = scalar_select 0, %s6, %s4
  $region1: #{tpu_custom_call.1} parent=0
    #allocation2 [shape = 'u8[131072]{0}', space=vmem, size = 0x20000, scoped, tag = 'input window, operand 0, single buffered']
    #allocation3 [shape = 's32[1]{0}', space=sflag, size = 0x4, scoped, tag = 'scoped memory for tpu_custom_call.1']
    #allocation4 [shape = 'u8[65536]{0}', space=vmem, size = 0x10000, scoped, tag = 'input window, operand 1, single buffered']
    #allocation5 [shape = 's32[1]{0}', space=sflag, size = 0x4, scoped, tag = 'scoped memory for tpu_custom_call.1']
    %8 = vsyncpa [#allocation3], 0
    %9 = vsyncpa [#allocation5], 0
    // Predicated region
    $region2: #{tpu_custom_call.1} parent=1 // pred_check
      _
    $region3: #{tpu_custom_call.1} parent=1 // pred_check_branch
      %11 = sbr.rel (0) target = $region5
    $region4: #{tpu_custom_call.1} parent=1 // pred_region
      %13 = vsyncadd [#allocation3], 0
      %s14 = sshll.u32 %s0, 4
      %s15 = int_to_ptr.hbm [resolvable:$true] %s14
      %s16 = sshll.u32 [#allocation2], 4
      %s17 = int_to_ptr.vmem [resolvable:$true] %s16
      %22 = dma.hbm_to_vmem [thread:$0]  %s15, 4096, %s17, [#allocation3], 128, 128, 8
    $region5: #{tpu_custom_call.1} parent=1 // pred_fallthru
      _
    // Predicated region
    $region6: #{tpu_custom_call.1} parent=1 // pred_check
      _
    $region7: #{tpu_custom_call.1} parent=1 // pred_check_branch
      %24 = sbr.rel (0) target = $region9
    $region8: #{tpu_custom_call.1} parent=1 // pred_region
      %26 = vsyncadd [#allocation5], 0
      %s27 = sshll.u32 %s1, 4
      %s28 = int_to_ptr.hbm [resolvable:$true] %s27
      %s29 = sshll.u32 [#allocation4], 4
      %s30 = int_to_ptr.vmem [resolvable:$true] %s29
      %35 = dma.hbm_to_vmem [thread:$0]  %s28, 2048, %s30, [#allocation5], 128, 128, 8
    $region9: #{tpu_custom_call.1} parent=1 // pred_fallthru
      _
    // Predicated region
    $region10: #{tpu_custom_call.1} parent=1 // pred_check
      _
    $region11: #{tpu_custom_call.1} parent=1 // pred_check_branch
      %37 = sbr.rel (0) target = $region13
    $region12: #{tpu_custom_call.1} parent=1 // pred_region
      _
    $region13: #{tpu_custom_call.1} parent=1 // pred_fallthru
      _
    // Predicated region
    $region14: #{tpu_custom_call.1} parent=1 // pred_check
      _
    $region15: #{tpu_custom_call.1} parent=1 // pred_check_branch
      %39 = sbr.rel (0) target = $region17
    $region16: #{tpu_custom_call.1} parent=1 // pred_region
      %41 = dma.done [#allocation3], 4096
    $region17: #{tpu_custom_call.1} parent=1 // pred_fallthru
      _
    // Predicated region
    $region18: #{tpu_custom_call.1} parent=1 // pred_check
      _
    $region19: #{tpu_custom_call.1} parent=1 // pred_check_branch
      %43 = sbr.rel (0) target = $region21
    $region20: #{tpu_custom_call.1} parent=1 // pred_region
      %45 = dma.done [#allocation5], 2048
    $region21: #{tpu_custom_call.1} parent=1 // pred_fallthru
      _
    %v46 = vld [vmem:[#allocation2] sm:$0xff]
    %v47 = vld [vmem:[#allocation2 + $0x8] sm:$0xff]
    %v48 = vld [vmem:[#allocation2 + $0x10] sm:$0xff]
    %v49 = vld [vmem:[#allocation2 + $0x18] sm:$0xff]
    %v50 = vld [vmem:[#allocation2 + $0x20] sm:$0xff]
    %v51 = vld [vmem:[#allocation2 + $0x28] sm:$0xff]
    %v52 = vld [vmem:[#allocation2 + $0x30] sm:$0xff]
    %v53 = vld [vmem:[#allocation2 + $0x38] sm:$0xff]
    %v54 = vld [vmem:[#allocation2 + $0x40] sm:$0xff]
    %v55 = vld [vmem:[#allocation2 + $0x48] sm:$0xff]
    %v56 = vld [vmem:[#allocation2 + $0x50] sm:$0xff]
    %v57 = vld [vmem:[#allocation2 + $0x58] sm:$0xff]
    %v58 = vld [vmem:[#allocation2 + $0x60] sm:$0xff]
    %v59 = vld [vmem:[#allocation2 + $0x68] sm:$0xff]
    %v60 = vld [vmem:[#allocation2 + $0x70] sm:$0xff]
    %v61 = vld [vmem:[#allocation2 + $0x78] sm:$0xff]
    %v62 = vld [vmem:[#allocation2 + $0x80] sm:$0xff]
    %v63 = vld [vmem:[#allocation2 + $0x88] sm:$0xff]
    %v64 = vld [vmem:[#allocation2 + $0x90] sm:$0xff]
    %v65 = vld [vmem:[#allocation2 + $0x98] sm:$0xff]
    %v66 = vld [vmem:[#allocation2 + $0xa0] sm:$0xff]
    %v67 = vld [vmem:[#allocation2 + $0xa8] sm:$0xff]
    %v68 = vld [vmem:[#allocation2 + $0xb0] sm:$0xff]
    %v69 = vld [vmem:[#allocation2 + $0xb8] sm:$0xff]
    %v70 = vld [vmem:[#allocation2 + $0xc0] sm:$0xff]
    %v71 = vld [vmem:[#allocation2 + $0xc8] sm:$0xff]
    %v72 = vld [vmem:[#allocation2 + $0xd0] sm:$0xff]
    %v73 = vld [vmem:[#allocation2 + $0xd8] sm:$0xff]
    %v74 = vld [vmem:[#allocation2 + $0xe0] sm:$0xff]
    %v75 = vld [vmem:[#allocation2 + $0xe8] sm:$0xff]
    %v76 = vld [vmem:[#allocation2 + $0xf0] sm:$0xff]
    %v77 = vld [vmem:[#allocation2 + $0xf8] sm:$0xff]
    %vm78 = vcmask 523264
    %v79 = vsel %vm78, %v46, 0.0
    %80 = vadd.xlane.f32.xlu0 %v79
    %v81 = vpop.xlane.xlu0 %80
    %v82 = vsel %vm78, %v48, 0.0
    %83 = vadd.xlane.f32.xlu0 %v82
    %v84 = vpop.xlane.xlu0 %83
    %v85 = vsel %vm78, %v50, 0.0
    %86 = vadd.xlane.f32.xlu0 %v85
    %v87 = vpop.xlane.xlu0 %86
    %v88 = vsel %vm78, %v52, 0.0
    %89 = vadd.xlane.f32.xlu0 %v88
    %v90 = vpop.xlane.xlu0 %89
    %v91 = vsel %vm78, %v54, 0.0
    %92 = vadd.xlane.f32.xlu0 %v91
    %v93 = vpop.xlane.xlu0 %92
    %v94 = vsel %vm78, %v56, 0.0
    %95 = vadd.xlane.f32.xlu0 %v94
    %v96 = vpop.xlane.xlu0 %95
    %v97 = vsel %vm78, %v58, 0.0
    %98 = vadd.xlane.f32.xlu0 %v97
    %v99 = vpop.xlane.xlu0 %98
    %v100 = vsel %vm78, %v60, 0.0
    %101 = vadd.xlane.f32.xlu0 %v100
    %v102 = vpop.xlane.xlu0 %101
    %v103 = vsel %vm78, %v62, 0.0
    %104 = vadd.xlane.f32.xlu0 %v103
    %v105 = vpop.xlane.xlu0 %104
    %v106 = vsel %vm78, %v64, 0.0
    %107 = vadd.xlane.f32.xlu0 %v106
    %v108 = vpop.xlane.xlu0 %107
    %v109 = vsel %vm78, %v66, 0.0
    %110 = vadd.xlane.f32.xlu0 %v109
    %v111 = vpop.xlane.xlu0 %110
    %v112 = vsel %vm78, %v68, 0.0
    %113 = vadd.xlane.f32.xlu0 %v112
    %v114 = vpop.xlane.xlu0 %113
    %v115 = vsel %vm78, %v70, 0.0
    %116 = vadd.xlane.f32.xlu0 %v115
    %v117 = vpop.xlane.xlu0 %116
    %v118 = vsel %vm78, %v72, 0.0
    %119 = vadd.xlane.f32.xlu0 %v118
    %v120 = vpop.xlane.xlu0 %119
    %v121 = vsel %vm78, %v74, 0.0
    %122 = vadd.xlane.f32.xlu0 %v121
    %v123 = vpop.xlane.xlu0 %122
    %v124 = vsel %vm78, %v76, 0.0
    %125 = vadd.xlane.f32.xlu0 %v124
    %v126 = vpop.xlane.xlu0 %125
    %v127 = vsel %vm78, %v47, 0.0
    %128 = vadd.xlane.f32.xlu0 %v127
    %v129 = vpop.xlane.xlu0 %128
    %v130 = vsel %vm78, %v49, 0.0
    %131 = vadd.xlane.f32.xlu0 %v130
    %v132 = vpop.xlane.xlu0 %131
    %v133 = vsel %vm78, %v51, 0.0
    %134 = vadd.xlane.f32.xlu0 %v133
    %v135 = vpop.xlane.xlu0 %134
    %v136 = vsel %vm78, %v53, 0.0
    %137 = vadd.xlane.f32.xlu0 %v136
    %v138 = vpop.xlane.xlu0 %137
    %v139 = vsel %vm78, %v55, 0.0
    %140 = vadd.xlane.f32.xlu0 %v139
    %v141 = vpop.xlane.xlu0 %140
    %v142 = vsel %vm78, %v57, 0.0
    %143 = vadd.xlane.f32.xlu0 %v142
    %v144 = vpop.xlane.xlu0 %143
    %v145 = vsel %vm78, %v59, 0.0
    %146 = vadd.xlane.f32.xlu0 %v145
    %v147 = vpop.xlane.xlu0 %146
    %v148 = vsel %vm78, %v61, 0.0
    %149 = vadd.xlane.f32.xlu0 %v148
    %v150 = vpop.xlane.xlu0 %149
    %v151 = vsel %vm78, %v63, 0.0
    %152 = vadd.xlane.f32.xlu0 %v151
    %v153 = vpop.xlane.xlu0 %152
    %v154 = vsel %vm78, %v65, 0.0
    %155 = vadd.xlane.f32.xlu0 %v154
    %v156 = vpop.xlane.xlu0 %155
    %v157 = vsel %vm78, %v67, 0.0
    %158 = vadd.xlane.f32.xlu0 %v157
    %v159 = vpop.xlane.xlu0 %158
    %v160 = vsel %vm78, %v69, 0.0
    %161 = vadd.xlane.f32.xlu0 %v160
    %v162 = vpop.xlane.xlu0 %161
    %v163 = vsel %vm78, %v71, 0.0
    %164 = vadd.xlane.f32.xlu0 %v163
    %v165 = vpop.xlane.xlu0 %164
    %v166 = vsel %vm78, %v73, 0.0
    %167 = vadd.xlane.f32.xlu0 %v166
    %v168 = vpop.xlane.xlu0 %167
    %v169 = vsel %vm78, %v75, 0.0
    %170 = vadd.xlane.f32.xlu0 %v169
    %v171 = vpop.xlane.xlu0 %170
    %v172 = vsel %vm78, %v77, 0.0
    %173 = vadd.xlane.f32.xlu0 %v172
    %v174 = vpop.xlane.xlu0 %173
    %v175 = vadd.f32 %v81, %v129
    %v176 = vadd.f32 %v84, %v132
    %v177 = vadd.f32 %v87, %v135
    %v178 = vadd.f32 %v90, %v138
    %v179 = vadd.f32 %v93, %v141
    %v180 = vadd.f32 %v96, %v144
    %v181 = vadd.f32 %v99, %v147
    %v182 = vadd.f32 %v102, %v150
    %v183 = vadd.f32 %v105, %v153
    %v184 = vadd.f32 %v108, %v156
    %v185 = vadd.f32 %v111, %v159
    %v186 = vadd.f32 %v114, %v162
    %v187 = vadd.f32 %v117, %v165
    %v188 = vadd.f32 %v120, %v168
    %v189 = vadd.f32 %v123, %v171
    %v190 = vadd.f32 %v126, %v174
    %v191 = vmul.f32 %v175, 0.0078125
    %v192 = vmul.f32 %v176, 0.0078125
    %v193 = vmul.f32 %v177, 0.0078125
    %v194 = vmul.f32 %v178, 0.0078125
    %v195 = vmul.f32 %v179, 0.0078125
    %v196 = vmul.f32 %v180, 0.0078125
    %v197 = vmul.f32 %v181, 0.0078125
    %v198 = vmul.f32 %v182, 0.0078125
    %v199 = vmul.f32 %v183, 0.0078125
    %v200 = vmul.f32 %v184, 0.0078125
    %v201 = vmul.f32 %v185, 0.0078125
    %v202 = vmul.f32 %v186, 0.0078125
    %v203 = vmul.f32 %v187, 0.0078125
    %v204 = vmul.f32 %v188, 0.0078125
    %v205 = vmul.f32 %v189, 0.0078125
    %v206 = vmul.f32 %v190, 0.0078125
    %v207 = vsub.f32 %v46, %v191
    %v208 = vsub.f32 %v48, %v192
    %v209 = vsub.f32 %v50, %v193
    %v210 = vsub.f32 %v52, %v194
    %v211 = vsub.f32 %v54, %v195
    %v212 = vsub.f32 %v56, %v196
    %v213 = vsub.f32 %v58, %v197
    %v214 = vsub.f32 %v60, %v198
    %v215 = vsub.f32 %v62, %v199
    %v216 = vsub.f32 %v64, %v200
    %v217 = vsub.f32 %v66, %v201
    %v218 = vsub.f32 %v68, %v202
    %v219 = vsub.f32 %v70, %v203
    %v220 = vsub.f32 %v72, %v204
    %v221 = vsub.f32 %v74, %v205
    %v222 = vsub.f32 %v76, %v206
    %v223 = vsub.f32 %v47, %v191
    %v224 = vsub.f32 %v49, %v192
    %v225 = vsub.f32 %v51, %v193
    %v226 = vsub.f32 %v53, %v194
    %v227 = vsub.f32 %v55, %v195
    %v228 = vsub.f32 %v57, %v196
    %v229 = vsub.f32 %v59, %v197
    %v230 = vsub.f32 %v61, %v198
    %v231 = vsub.f32 %v63, %v199
    %v232 = vsub.f32 %v65, %v200
    %v233 = vsub.f32 %v67, %v201
    %v234 = vsub.f32 %v69, %v202
    %v235 = vsub.f32 %v71, %v203
    %v236 = vsub.f32 %v73, %v204
    %v237 = vsub.f32 %v75, %v205
    %v238 = vsub.f32 %v77, %v206
    %v239 = vmul.f32 %v207, %v207
    %v240 = vmul.f32 %v208, %v208
    %v241 = vmul.f32 %v209, %v209
    %v242 = vmul.f32 %v210, %v210
    %v243 = vmul.f32 %v211, %v211
    %v244 = vmul.f32 %v212, %v212
    %v245 = vmul.f32 %v213, %v213
    %v246 = vmul.f32 %v214, %v214
    %v247 = vmul.f32 %v215, %v215
    %v248 = vmul.f32 %v216, %v216
    %v249 = vmul.f32 %v217, %v217
    %v250 = vmul.f32 %v218, %v218
    %v251 = vmul.f32 %v219, %v219
    %v252 = vmul.f32 %v220, %v220
    %v253 = vmul.f32 %v221, %v221
    %v254 = vmul.f32 %v222, %v222
    %v255 = vsel %vm78, %v239, 0.0
    %256 = vadd.xlane.f32.xlu0 %v255
    %v257 = vpop.xlane.xlu0 %256
    %v258 = vsel %vm78, %v240, 0.0
    %259 = vadd.xlane.f32.xlu0 %v258
    %v260 = vpop.xlane.xlu0 %259
    %v261 = vsel %vm78, %v241, 0.0
    %262 = vadd.xlane.f32.xlu0 %v261
    %v263 = vpop.xlane.xlu0 %262
    %v264 = vsel %vm78, %v242, 0.0
    %265 = vadd.xlane.f32.xlu0 %v264
    %v266 = vpop.xlane.xlu0 %265
    %v267 = vsel %vm78, %v243, 0.0
    %268 = vadd.xlane.f32.xlu0 %v267
    %v269 = vpop.xlane.xlu0 %268
    %v270 = vsel %vm78, %v244, 0.0
    %271 = vadd.xlane.f32.xlu0 %v270
    %v272 = vpop.xlane.xlu0 %271
    %v273 = vsel %vm78, %v245, 0.0
    %274 = vadd.xlane.f32.xlu0 %v273
    %v275 = vpop.xlane.xlu0 %274
    %v276 = vsel %vm78, %v246, 0.0
    %277 = vadd.xlane.f32.xlu0 %v276
    %v278 = vpop.xlane.xlu0 %277
    %v279 = vsel %vm78, %v247, 0.0
    %280 = vadd.xlane.f32.xlu0 %v279
    %v281 = vpop.xlane.xlu0 %280
    %v282 = vsel %vm78, %v248, 0.0
    %283 = vadd.xlane.f32.xlu0 %v282
    %v284 = vpop.xlane.xlu0 %283
    %v285 = vsel %vm78, %v249, 0.0
    %286 = vadd.xlane.f32.xlu0 %v285
    %v287 = vpop.xlane.xlu0 %286
    %v288 = vsel %vm78, %v250, 0.0
    %289 = vadd.xlane.f32.xlu0 %v288
    %v290 = vpop.xlane.xlu0 %289
    %v291 = vsel %vm78, %v251, 0.0
    %292 = vadd.xlane.f32.xlu0 %v291
    %v293 = vpop.xlane.xlu0 %292
    %v294 = vsel %vm78, %v252, 0.0
    %295 = vadd.xlane.f32.xlu0 %v294
    %v296 = vpop.xlane.xlu0 %295
    %v297 = vsel %vm78, %v253, 0.0
    %298 = vadd.xlane.f32.xlu0 %v297
    %v299 = vpop.xlane.xlu0 %298
    %v300 = vsel %vm78, %v254, 0.0
    %301 = vadd.xlane.f32.xlu0 %v300
    %v302 = vpop.xlane.xlu0 %301
    %v303 = vmul.f32 %v223, %v223
    %v304 = vmul.f32 %v224, %v224
    %v305 = vmul.f32 %v225, %v225
    %v306 = vmul.f32 %v226, %v226
    %v307 = vmul.f32 %v227, %v227
    %v308 = vmul.f32 %v228, %v228
    %v309 = vmul.f32 %v229, %v229
    %v310 = vmul.f32 %v230, %v230
    %v311 = vmul.f32 %v231, %v231
    %v312 = vmul.f32 %v232, %v232
    %v313 = vmul.f32 %v233, %v233
    %v314 = vmul.f32 %v234, %v234
    %v315 = vmul.f32 %v235, %v235
    %v316 = vmul.f32 %v236, %v236
    %v317 = vmul.f32 %v237, %v237
    %v318 = vmul.f32 %v238, %v238
    %v319 = vsel %vm78, %v303, 0.0
    %320 = vadd.xlane.f32.xlu0 %v319
    %v321 = vpop.xlane.xlu0 %320
    %v322 = vsel %vm78, %v304, 0.0
    %323 = vadd.xlane.f32.xlu0 %v322
    %v324 = vpop.xlane.xlu0 %323
    %v325 = vsel %vm78, %v305, 0.0
    %326 = vadd.xlane.f32.xlu0 %v325
    %v327 = vpop.xlane.xlu0 %326
    %v328 = vsel %vm78, %v306, 0.0
    %329 = vadd.xlane.f32.xlu0 %v328
    %v330 = vpop.xlane.xlu0 %329
    %v331 = vsel %vm78, %v307, 0.0
    %332 = vadd.xlane.f32.xlu0 %v331
    %v333 = vpop.xlane.xlu0 %332
    %v334 = vsel %vm78, %v308, 0.0
    %335 = vadd.xlane.f32.xlu0 %v334
    %v336 = vpop.xlane.xlu0 %335
    %v337 = vsel %vm78, %v309, 0.0
    %338 = vadd.xlane.f32.xlu0 %v337
    %v339 = vpop.xlane.xlu0 %338
    %v340 = vsel %vm78, %v310, 0.0
    %341 = vadd.xlane.f32.xlu0 %v340
    %v342 = vpop.xlane.xlu0 %341
    %v343 = vsel %vm78, %v311, 0.0
    %344 = vadd.xlane.f32.xlu0 %v343
    %v345 = vpop.xlane.xlu0 %344
    %v346 = vsel %vm78, %v312, 0.0
    %347 = vadd.xlane.f32.xlu0 %v346
    %v348 = vpop.xlane.xlu0 %347
    %v349 = vsel %vm78, %v313, 0.0
    %350 = vadd.xlane.f32.xlu0 %v349
    %v351 = vpop.xlane.xlu0 %350
    %v352 = vsel %vm78, %v314, 0.0
    %353 = vadd.xlane.f32.xlu0 %v352
    %v354 = vpop.xlane.xlu0 %353
    %v355 = vsel %vm78, %v315, 0.0
    %356 = vadd.xlane.f32.xlu0 %v355
    %v357 = vpop.xlane.xlu0 %356
    %v358 = vsel %vm78, %v316, 0.0
    %359 = vadd.xlane.f32.xlu0 %v358
    %v360 = vpop.xlane.xlu0 %359
    %v361 = vsel %vm78, %v317, 0.0
    %362 = vadd.xlane.f32.xlu0 %v361
    %v363 = vpop.xlane.xlu0 %362
    %v364 = vsel %vm78, %v318, 0.0
    %365 = vadd.xlane.f32.xlu0 %v364
    %v366 = vpop.xlane.xlu0 %365
    %v367 = vadd.f32 %v257, %v321
    %v368 = vadd.f32 %v260, %v324
    %v369 = vadd.f32 %v263, %v327
    %v370 = vadd.f32 %v266, %v330
    %v371 = vadd.f32 %v269, %v333
    %v372 = vadd.f32 %v272, %v336
    %v373 = vadd.f32 %v275, %v339
    %v374 = vadd.f32 %v278, %v342
    %v375 = vadd.f32 %v281, %v345
    %v376 = vadd.f32 %v284, %v348
    %v377 = vadd.f32 %v287, %v351
    %v378 = vadd.f32 %v290, %v354
    %v379 = vadd.f32 %v293, %v357
    %v380 = vadd.f32 %v296, %v360
    %v381 = vadd.f32 %v299, %v363
    %v382 = vadd.f32 %v302, %v366
    %v383 = vmul.f32 %v367, 0.0078125
    %v384 = vmul.f32 %v368, 0.0078125
    %v385 = vmul.f32 %v369, 0.0078125
    %v386 = vmul.f32 %v370, 0.0078125
    %v387 = vmul.f32 %v371, 0.0078125
    %v388 = vmul.f32 %v372, 0.0078125
    %v389 = vmul.f32 %v373, 0.0078125
    %v390 = vmul.f32 %v374, 0.0078125
    %v391 = vmul.f32 %v375, 0.0078125
    %v392 = vmul.f32 %v376, 0.0078125
    %v393 = vmul.f32 %v377, 0.0078125
    %v394 = vmul.f32 %v378, 0.0078125
    %v395 = vmul.f32 %v379, 0.0078125
    %v396 = vmul.f32 %v380, 0.0078125
    %v397 = vmul.f32 %v381, 0.0078125
    %v398 = vmul.f32 %v382, 0.0078125
    %v399 = vadd.f32 %v383, 1e-05
    %v400 = vadd.f32 %v384, 1e-05
    %v401 = vadd.f32 %v385, 1e-05
    %v402 = vadd.f32 %v386, 1e-05
    %v403 = vadd.f32 %v387, 1e-05
    %v404 = vadd.f32 %v388, 1e-05
    %v405 = vadd.f32 %v389, 1e-05
    %v406 = vadd.f32 %v390, 1e-05
    %v407 = vadd.f32 %v391, 1e-05
    %v408 = vadd.f32 %v392, 1e-05
    %v409 = vadd.f32 %v393, 1e-05
    %v410 = vadd.f32 %v394, 1e-05
    %v411 = vadd.f32 %v395, 1e-05
    %v412 = vadd.f32 %v396, 1e-05
    %v413 = vadd.f32 %v397, 1e-05
    %v414 = vadd.f32 %v398, 1e-05
    %v415 = vrsqrt.pop %v399
    %v416 = vmul.f32 %v415, %v399
    %v417 = vmul.f32 %v416, %v415
    %v418 = vmul.f32 0.5, %v417
    %v419 = vsub.f32 1.5, %v418
    %v420 = vmul.f32 %v415, %v419
    %vm421 = vweird.f32 %v399
    %vm422 = vweird.f32 %v415
    %vm423 = vmor %vm421, %vm422
    %v424 = vsel %vm423, %v415, %v420
    %v425 = vrsqrt.pop %v400
    %v426 = vmul.f32 %v425, %v400
    %v427 = vmul.f32 %v426, %v425
    %v428 = vmul.f32 0.5, %v427
    %v429 = vsub.f32 1.5, %v428
    %v430 = vmul.f32 %v425, %v429
    %vm431 = vweird.f32 %v400
    %vm432 = vweird.f32 %v425
    %vm433 = vmor %vm431, %vm432
    %v434 = vsel %vm433, %v425, %v430
    %v435 = vrsqrt.pop %v401
    %v436 = vmul.f32 %v435, %v401
    %v437 = vmul.f32 %v436, %v435
    %v438 = vmul.f32 0.5, %v437
    %v439 = vsub.f32 1.5, %v438
    %v440 = vmul.f32 %v435, %v439
    %vm441 = vweird.f32 %v401
    %vm442 = vweird.f32 %v435
    %vm443 = vmor %vm441, %vm442
    %v444 = vsel %vm443, %v435, %v440
    %v445 = vrsqrt.pop %v402
    %v446 = vmul.f32 %v445, %v402
    %v447 = vmul.f32 %v446, %v445
    %v448 = vmul.f32 0.5, %v447
    %v449 = vsub.f32 1.5, %v448
    %v450 = vmul.f32 %v445, %v449
    %vm451 = vweird.f32 %v402
    %vm452 = vweird.f32 %v445
    %vm453 = vmor %vm451, %vm452
    %v454 = vsel %vm453, %v445, %v450
    %v455 = vrsqrt.pop %v403
    %v456 = vmul.f32 %v455, %v403
    %v457 = vmul.f32 %v456, %v455
    %v458 = vmul.f32 0.5, %v457
    %v459 = vsub.f32 1.5, %v458
    %v460 = vmul.f32 %v455, %v459
    %vm461 = vweird.f32 %v403
    %vm462 = vweird.f32 %v455
    %vm463 = vmor %vm461, %vm462
    %v464 = vsel %vm463, %v455, %v460
    %v465 = vrsqrt.pop %v404
    %v466 = vmul.f32 %v465, %v404
    %v467 = vmul.f32 %v466, %v465
    %v468 = vmul.f32 0.5, %v467
    %v469 = vsub.f32 1.5, %v468
    %v470 = vmul.f32 %v465, %v469
    %vm471 = vweird.f32 %v404
    %vm472 = vweird.f32 %v465
    %vm473 = vmor %vm471, %vm472
    %v474 = vsel %vm473, %v465, %v470
    %v475 = vrsqrt.pop %v405
    %v476 = vmul.f32 %v475, %v405
    %v477 = vmul.f32 %v476, %v475
    %v478 = vmul.f32 0.5, %v477
    %v479 = vsub.f32 1.5, %v478
    %v480 = vmul.f32 %v475, %v479
    %vm481 = vweird.f32 %v405
    %vm482 = vweird.f32 %v475
    %vm483 = vmor %vm481, %vm482
    %v484 = vsel %vm483, %v475, %v480
    %v485 = vrsqrt.pop %v406
    %v486 = vmul.f32 %v485, %v406
    %v487 = vmul.f32 %v486, %v485
    %v488 = vmul.f32 0.5, %v487
    %v489 = vsub.f32 1.5, %v488
    %v490 = vmul.f32 %v485, %v489
    %vm491 = vweird.f32 %v406
    %vm492 = vweird.f32 %v485
    %vm493 = vmor %vm491, %vm492
    %v494 = vsel %vm493, %v485, %v490
    %v495 = vrsqrt.pop %v407
    %v496 = vmul.f32 %v495, %v407
    %v497 = vmul.f32 %v496, %v495
    %v498 = vmul.f32 0.5, %v497
    %v499 = vsub.f32 1.5, %v498
    %v500 = vmul.f32 %v495, %v499
    %vm501 = vweird.f32 %v407
    %vm502 = vweird.f32 %v495
    %vm503 = vmor %vm501, %vm502
    %v504 = vsel %vm503, %v495, %v500
    %v505 = vrsqrt.pop %v408
    %v506 = vmul.f32 %v505, %v408
    %v507 = vmul.f32 %v506, %v505
    %v508 = vmul.f32 0.5, %v507
    %v509 = vsub.f32 1.5, %v508
    %v510 = vmul.f32 %v505, %v509
    %vm511 = vweird.f32 %v408
    %vm512 = vweird.f32 %v505
    %vm513 = vmor %vm511, %vm512
    %v514 = vsel %vm513, %v505, %v510
    %v515 = vrsqrt.pop %v409
    %v516 = vmul.f32 %v515, %v409
    %v517 = vmul.f32 %v516, %v515
    %v518 = vmul.f32 0.5, %v517
    %v519 = vsub.f32 1.5, %v518
    %v520 = vmul.f32 %v515, %v519
    %vm521 = vweird.f32 %v409
    %vm522 = vweird.f32 %v515
    %vm523 = vmor %vm521, %vm522
    %v524 = vsel %vm523, %v515, %v520
    %v525 = vrsqrt.pop %v410
    %v526 = vmul.f32 %v525, %v410
    %v527 = vmul.f32 %v526, %v525
    %v528 = vmul.f32 0.5, %v527
    %v529 = vsub.f32 1.5, %v528
    %v530 = vmul.f32 %v525, %v529
    %vm531 = vweird.f32 %v410
    %vm532 = vweird.f32 %v525
    %vm533 = vmor %vm531, %vm532
    %v534 = vsel %vm533, %v525, %v530
    %v535 = vrsqrt.pop %v411
    %v536 = vmul.f32 %v535, %v411
    %v537 = vmul.f32 %v536, %v535
    %v538 = vmul.f32 0.5, %v537
    %v539 = vsub.f32 1.5, %v538
    %v540 = vmul.f32 %v535, %v539
    %vm541 = vweird.f32 %v411
    %vm542 = vweird.f32 %v535
    %vm543 = vmor %vm541, %vm542
    %v544 = vsel %vm543, %v535, %v540
    %v545 = vrsqrt.pop %v412
    %v546 = vmul.f32 %v545, %v412
    %v547 = vmul.f32 %v546, %v545
    %v548 = vmul.f32 0.5, %v547
    %v549 = vsub.f32 1.5, %v548
    %v550 = vmul.f32 %v545, %v549
    %vm551 = vweird.f32 %v412
    %vm552 = vweird.f32 %v545
    %vm553 = vmor %vm551, %vm552
    %v554 = vsel %vm553, %v545, %v550
    %v555 = vrsqrt.pop %v413
    %v556 = vmul.f32 %v555, %v413
    %v557 = vmul.f32 %v556, %v555
    %v558 = vmul.f32 0.5, %v557
    %v559 = vsub.f32 1.5, %v558
    %v560 = vmul.f32 %v555, %v559
    %vm561 = vweird.f32 %v413
    %vm562 = vweird.f32 %v555
    %vm563 = vmor %vm561, %vm562
    %v564 = vsel %vm563, %v555, %v560
    %v565 = vrsqrt.pop %v414
    %v566 = vmul.f32 %v565, %v414
    %v567 = vmul.f32 %v566, %v565
    %v568 = vmul.f32 0.5, %v567
    %v569 = vsub.f32 1.5, %v568
    %v570 = vmul.f32 %v565, %v569
    %vm571 = vweird.f32 %v414
    %vm572 = vweird.f32 %v565
    %vm573 = vmor %vm571, %vm572
    %v574 = vsel %vm573, %v565, %v570
    %v575 = vld [vmem:[#allocation4] sm:$0xff]
    %v576 = vld [vmem:[#allocation4 + $0x8] sm:$0xff]
    %v577 = vld [vmem:[#allocation4 + $0x10] sm:$0xff]
    %v578 = vld [vmem:[#allocation4 + $0x18] sm:$0xff]
    %v579 = vld [vmem:[#allocation4 + $0x20] sm:$0xff]
    %v580 = vld [vmem:[#allocation4 + $0x28] sm:$0xff]
    %v581 = vld [vmem:[#allocation4 + $0x30] sm:$0xff]
    %v582 = vld [vmem:[#allocation4 + $0x38] sm:$0xff]
    %s583 = scalar_lea.vmem [#allocation4], 64
    %v584 = vld [vmem:[%s583] sm:$0xff]
    %v585 = vld [vmem:[%s583 + $0x8] sm:$0xff]
    %v586 = vld [vmem:[%s583 + $0x10] sm:$0xff]
    %v587 = vld [vmem:[%s583 + $0x18] sm:$0xff]
    %v588 = vld [vmem:[%s583 + $0x20] sm:$0xff]
    %v589 = vld [vmem:[%s583 + $0x28] sm:$0xff]
    %v590 = vld [vmem:[%s583 + $0x30] sm:$0xff]
    %v591 = vld [vmem:[%s583 + $0x38] sm:$0xff]
    %v593 = vsel %vm78, %v223, 0
    %v596 = vsel %vm78, %v224, 0
    %v599 = vsel %vm78, %v225, 0
    %v602 = vsel %vm78, %v226, 0
    %v605 = vsel %vm78, %v227, 0
    %v608 = vsel %vm78, %v228, 0
    %v611 = vsel %vm78, %v229, 0
    %v614 = vsel %vm78, %v230, 0
    %v617 = vsel %vm78, %v231, 0
    %v620 = vsel %vm78, %v232, 0
    %v623 = vsel %vm78, %v233, 0
    %v626 = vsel %vm78, %v234, 0
    %v629 = vsel %vm78, %v235, 0
    %v632 = vsel %vm78, %v236, 0
    %v635 = vsel %vm78, %v237, 0
    %v638 = vsel %vm78, %v238, 0
    %640 = vmatpush.msra.mxu0 0.0
    %641 = vmatpush.msra.mxu0 0.0
    %642 = vmatpush.msra.mxu0 0.0
    %643 = vmatpush.msra.mxu0 0.0
    %644 = vmatpush.msra.mxu0 0.0
    %645 = vmatpush.msra.mxu0 0.0
    %646 = vmatpush.msra.mxu0 0.0
    %647 = vmatpush.msra.mxu0 0.0
    %648 = vmatpush.msra.mxu0 %v591
    %649 = vmatpush.msra.mxu0 %v590
    %650 = vmatpush.msra.mxu0 %v589
    %651 = vmatpush.msra.mxu0 %v588
    %652 = vmatpush.msra.mxu0 %v587
    %653 = vmatpush.msra.mxu0 %v586
    %654 = vmatpush.msra.mxu0 %v585
    %655 = vmatpush.msra.mxu0 %v584
    %656 = vmatmul.f32.gmra.mxu0 %v593
    %v657 = vpop.f32.mrf.mxu0
    %v658 = vadd.f32 0.0, %v657
    %659 = vmatmul.f32.gmra.mxu0 %v596
    %v660 = vpop.f32.mrf.mxu0
    %v661 = vadd.f32 0.0, %v660
    %662 = vmatmul.f32.gmra.mxu0 %v599
    %v663 = vpop.f32.mrf.mxu0
    %v664 = vadd.f32 0.0, %v663
    %665 = vmatmul.f32.gmra.mxu0 %v602
    %v666 = vpop.f32.mrf.mxu0
    %v667 = vadd.f32 0.0, %v666
    %668 = vmatmul.f32.gmra.mxu0 %v605
    %v669 = vpop.f32.mrf.mxu0
    %v670 = vadd.f32 0.0, %v669
    %671 = vmatmul.f32.gmra.mxu0 %v608
    %v672 = vpop.f32.mrf.mxu0
    %v673 = vadd.f32 0.0, %v672
    %674 = vmatmul.f32.gmra.mxu0 %v611
    %v675 = vpop.f32.mrf.mxu0
    %v676 = vadd.f32 0.0, %v675
    %677 = vmatmul.f32.gmra.mxu0 %v614
    %v678 = vpop.f32.mrf.mxu0
    %v679 = vadd.f32 0.0, %v678
    %680 = vmatmul.f32.gmra.mxu0 %v617
    %v681 = vpop.f32.mrf.mxu0
    %v682 = vadd.f32 0.0, %v681
    %683 = vmatmul.f32.gmra.mxu0 %v620
    %v684 = vpop.f32.mrf.mxu0
    %v685 = vadd.f32 0.0, %v684
    %686 = vmatmul.f32.gmra.mxu0 %v623
    %v687 = vpop.f32.mrf.mxu0
    %v688 = vadd.f32 0.0, %v687
    %689 = vmatmul.f32.gmra.mxu0 %v626
    %v690 = vpop.f32.mrf.mxu0
    %v691 = vadd.f32 0.0, %v690
    %692 = vmatmul.f32.gmra.mxu0 %v629
    %v693 = vpop.f32.mrf.mxu0
    %v694 = vadd.f32 0.0, %v693
    %695 = vmatmul.f32.gmra.mxu0 %v632
    %v696 = vpop.f32.mrf.mxu0
    %v697 = vadd.f32 0.0, %v696
    %698 = vmatmul.f32.gmra.mxu0 %v635
    %v699 = vpop.f32.mrf.mxu0
    %v700 = vadd.f32 0.0, %v699
    %701 = vmatmul.f32.gmra.mxu0 %v638
    %v702 = vpop.f32.mrf.mxu0
    %v703 = vadd.f32 0.0, %v702
    %704 = vdwg.mxu0
    %v706 = vsel %vm78, %v207, 0
    %v709 = vsel %vm78, %v208, 0
    %v712 = vsel %vm78, %v209, 0
    %v715 = vsel %vm78, %v210, 0
    %v718 = vsel %vm78, %v211, 0
    %v721 = vsel %vm78, %v212, 0
    %v724 = vsel %vm78, %v213, 0
    %v727 = vsel %vm78, %v214, 0
    %v730 = vsel %vm78, %v215, 0
    %v733 = vsel %vm78, %v216, 0
    %v736 = vsel %vm78, %v217, 0
    %v739 = vsel %vm78, %v218, 0
    %v742 = vsel %vm78, %v219, 0
    %v745 = vsel %vm78, %v220, 0
    %v748 = vsel %vm78, %v221, 0
    %v751 = vsel %vm78, %v222, 0
    %753 = vmatpush.msra.mxu0 0.0
    %754 = vmatpush.msra.mxu0 0.0
    %755 = vmatpush.msra.mxu0 0.0
    %756 = vmatpush.msra.mxu0 0.0
    %757 = vmatpush.msra.mxu0 0.0
    %758 = vmatpush.msra.mxu0 0.0
    %759 = vmatpush.msra.mxu0 0.0
    %760 = vmatpush.msra.mxu0 0.0
    %761 = vmatpush.msra.mxu0 %v582
    %762 = vmatpush.msra.mxu0 %v581
    %763 = vmatpush.msra.mxu0 %v580
    %764 = vmatpush.msra.mxu0 %v579
    %765 = vmatpush.msra.mxu0 %v578
    %766 = vmatpush.msra.mxu0 %v577
    %767 = vmatpush.msra.mxu0 %v576
    %768 = vmatpush.msra.mxu0 %v575
    %769 = vmatmul.f32.gmra.mxu0 %v706
    %v770 = vpop.f32.mrf.mxu0
    %v771 = vadd.f32 %v658, %v770
    %772 = vmatmul.f32.gmra.mxu0 %v709
    %v773 = vpop.f32.mrf.mxu0
    %v774 = vadd.f32 %v661, %v773
    %775 = vmatmul.f32.gmra.mxu0 %v712
    %v776 = vpop.f32.mrf.mxu0
    %v777 = vadd.f32 %v664, %v776
    %778 = vmatmul.f32.gmra.mxu0 %v715
    %v779 = vpop.f32.mrf.mxu0
    %v780 = vadd.f32 %v667, %v779
    %781 = vmatmul.f32.gmra.mxu0 %v718
    %v782 = vpop.f32.mrf.mxu0
    %v783 = vadd.f32 %v670, %v782
    %784 = vmatmul.f32.gmra.mxu0 %v721
    %v785 = vpop.f32.mrf.mxu0
    %v786 = vadd.f32 %v673, %v785
    %787 = vmatmul.f32.gmra.mxu0 %v724
    %v788 = vpop.f32.mrf.mxu0
    %v789 = vadd.f32 %v676, %v788
    %790 = vmatmul.f32.gmra.mxu0 %v727
    %v791 = vpop.f32.mrf.mxu0
    %v792 = vadd.f32 %v679, %v791
    %793 = vmatmul.f32.gmra.mxu0 %v730
    %v794 = vpop.f32.mrf.mxu0
    %v795 = vadd.f32 %v682, %v794
    %796 = vmatmul.f32.gmra.mxu0 %v733
    %v797 = vpop.f32.mrf.mxu0
    %v798 = vadd.f32 %v685, %v797
    %799 = vmatmul.f32.gmra.mxu0 %v736
    %v800 = vpop.f32.mrf.mxu0
    %v801 = vadd.f32 %v688, %v800
    %802 = vmatmul.f32.gmra.mxu0 %v739
    %v803 = vpop.f32.mrf.mxu0
    %v804 = vadd.f32 %v691, %v803
    %805 = vmatmul.f32.gmra.mxu0 %v742
    %v806 = vpop.f32.mrf.mxu0
    %v807 = vadd.f32 %v694, %v806
    %808 = vmatmul.f32.gmra.mxu0 %v745
    %v809 = vpop.f32.mrf.mxu0
    %v810 = vadd.f32 %v697, %v809
    %811 = vmatmul.f32.gmra.mxu0 %v748
    %v812 = vpop.f32.mrf.mxu0
    %v813 = vadd.f32 %v700, %v812
    %814 = vmatmul.f32.gmra.mxu0 %v751
    %v815 = vpop.f32.mrf.mxu0
    %v816 = vadd.f32 %v703, %v815
    %817 = vdwg.mxu0
    %v818 = vmul.f32 %v771, %v424
    %v819 = vmul.f32 %v774, %v434
    %v820 = vmul.f32 %v777, %v444
    %v821 = vmul.f32 %v780, %v454
    %v822 = vmul.f32 %v783, %v464
    %v823 = vmul.f32 %v786, %v474
    %v824 = vmul.f32 %v789, %v484
    %v825 = vmul.f32 %v792, %v494
    %v826 = vmul.f32 %v795, %v504
    %v827 = vmul.f32 %v798, %v514
    %v828 = vmul.f32 %v801, %v524
    %v829 = vmul.f32 %v804, %v534
    %v830 = vmul.f32 %v807, %v544
    %v831 = vmul.f32 %v810, %v554
    %v832 = vmul.f32 %v813, %v564
    %v833 = vmul.f32 %v816, %v574
    %v834 = vld [vmem:[%s2] sm:$0x1]
    %v836 = vperm.slane %v834, 0
    %v838 = vadd.f32 %v818, %v836
    %v839 = vadd.f32 %v819, %v836
    %v840 = vadd.f32 %v820, %v836
    %v841 = vadd.f32 %v821, %v836
    %v842 = vadd.f32 %v822, %v836
    %v843 = vadd.f32 %v823, %v836
    %v844 = vadd.f32 %v824, %v836
    %v845 = vadd.f32 %v825, %v836
    %v846 = vadd.f32 %v826, %v836
    %v847 = vadd.f32 %v827, %v836
    %v848 = vadd.f32 %v828, %v836
    %v849 = vadd.f32 %v829, %v836
    %v850 = vadd.f32 %v830, %v836
    %v851 = vadd.f32 %v831, %v836
    %v852 = vadd.f32 %v832, %v836
    %v853 = vadd.f32 %v833, %v836
    %854 = vst.msk [vmem:[%s3] sm:$0xff] %vm78, %v838
    %855 = vst.msk [vmem:[%s3 + $0x8] sm:$0xff] %vm78, %v839
    %856 = vst.msk [vmem:[%s3 + $0x10] sm:$0xff] %vm78, %v840
    %857 = vst.msk [vmem:[%s3 + $0x18] sm:$0xff] %vm78, %v841
    %858 = vst.msk [vmem:[%s3 + $0x20] sm:$0xff] %vm78, %v842
    %859 = vst.msk [vmem:[%s3 + $0x28] sm:$0xff] %vm78, %v843
    %860 = vst.msk [vmem:[%s3 + $0x30] sm:$0xff] %vm78, %v844
    %861 = vst.msk [vmem:[%s3 + $0x38] sm:$0xff] %vm78, %v845
    %862 = vst.msk [vmem:[%s3 + $0x40] sm:$0xff] %vm78, %v846
    %863 = vst.msk [vmem:[%s3 + $0x48] sm:$0xff] %vm78, %v847
    %864 = vst.msk [vmem:[%s3 + $0x50] sm:$0xff] %vm78, %v848
    %865 = vst.msk [vmem:[%s3 + $0x58] sm:$0xff] %vm78, %v849
    %866 = vst.msk [vmem:[%s3 + $0x60] sm:$0xff] %vm78, %v850
    %867 = vst.msk [vmem:[%s3 + $0x68] sm:$0xff] %vm78, %v851
    %868 = vst.msk [vmem:[%s3 + $0x70] sm:$0xff] %vm78, %v852
    %869 = vst.msk [vmem:[%s3 + $0x78] sm:$0xff] %vm78, %v853
    // Predicated region
    $region22: #{tpu_custom_call.1} parent=1 // pred_check
      _
    $region23: #{tpu_custom_call.1} parent=1 // pred_check_branch
      %871 = sbr.rel (0) target = $region25
    $region24: #{tpu_custom_call.1} parent=1 // pred_region
      _
    $region25: #{tpu_custom_call.1} parent=1 // pred_fallthru
      _
    // Predicated region
    $region26: #{tpu_custom_call.1} parent=1 // pred_check
      _
    $region27: #{tpu_custom_call.1} parent=1 // pred_check_branch
      %873 = sbr.rel (0) target = $region29
    $region28: #{tpu_custom_call.1} parent=1 // pred_region
      _
    $region29: #{tpu_custom_call.1} parent=1 // pred_fallthru
      _
    %874 = vsyncpa [#allocation3], 1
    %875 = vsyncpa [#allocation5], 1

</llo_original>
